<compile_context>
chip_gen: v6e
topology: v6e:2x2x1
jax: 0.10.0
libtpu: 0.0.40
codegen_flags: <defaults>
</compile_context>

<pallas_src>
import math
from functools import partial

import jax
import jax.numpy as jnp
from jax import lax
from jax.experimental import pallas as pl
from jax.experimental.pallas import tpu as pltpu

BN_EPS = 1e-5                      # nn.BatchNorm2d default
_LANE = 128                        # vreg lane width
_SUBLANE = 8                       # vreg sublane count (f32)

_BUDGETS = None


def _hw_budgets():
    """(vmem_limit_bytes, activation_tile_bytes_target) tuned per TPU generation."""
    global _BUDGETS
    if _BUDGETS is None:
        try:
            vmem_cap = pltpu.get_tpu_info().vmem_capacity_bytes
        except Exception:
            vmem_cap = 64 * 1024 * 1024
        if vmem_cap >= 100 * 1024 * 1024:
            # v5e / v6e: 128 MiB physical VMEM -> big tiles amortize per-step overhead.
            _BUDGETS = (96 * 1024 * 1024, 12 * 1024 * 1024)
        else:
            # v7x: 64 MiB per-TC VMEM -> moderate tiles, keep 2x(in+out) well under cap.
            _BUDGETS = (48 * 1024 * 1024, 8 * 1024 * 1024)
    return _BUDGETS


def _round_up(x, m):
    return ((x + m - 1) // m) * m


def _pick_row_tiling(rows, k, bytes_per_row, tile_bytes_target):
    """Row tile: multiple of lcm(8*K, 16) (whole neighbor groups per tile, bf16
    sublane packing, 8-row-aligned pooled output), sized to the per-generation byte
    target; tile count is kept even (when >1) so v7x's two TensorCores stay balanced."""
    align = math.lcm(_SUBLANE * k, 16)
    budget_rows = max(align, (tile_bytes_target // bytes_per_row) // align * align)
    tile_rows = min(_round_up(rows, align), budget_rows)
    num_tiles = -(-rows // tile_rows)
    if num_tiles > 1 and num_tiles % 2:
        num_tiles += 1
        tile_rows = _round_up(-(-rows // num_tiles), align)
    rows_pad = num_tiles * tile_rows
    return tile_rows, rows_pad


# ----------------------------------------------------------------------------
# Kernel A: [optional folded-BN + ReLU of previous layer] -> bf16 matmul (1x1 conv)
#           -> per-tile per-channel sum / sum-of-squares for this layer's BN.
# ----------------------------------------------------------------------------
def _conv_stats_kernel(*refs, apply_bn, mask_rows, tile_rows, total_rows):
    if apply_bn:
        x_ref, scale_ref, shift_ref, w_ref, h_ref, stats_ref = refs
    else:
        x_ref, w_ref, h_ref, stats_ref = refs

    if apply_bn:
        # Folded BatchNorm (scale/shift) + ReLU of the *previous* layer, fused here so
        # each (bf16) intermediate activation makes exactly one HBM round trip/layer.
        x = jnp.maximum(
            x_ref[...].astype(jnp.float32) * scale_ref[...] + shift_ref[...], 0.0)
        if mask_rows:
            # Re-zero the zero-padded tail rows (BN's shift made them nonzero) so they
            # never contribute to this layer's batch statistics.  Narrow (rows, 1)
            # iota; the lane broadcast in the select is free.
            row = (pl.program_id(0) * tile_rows
                   + lax.broadcasted_iota(jnp.int32, (tile_rows, 1), 0))
            x = jnp.where(row < total_rows, x, 0.0)
        x = x.astype(jnp.bfloat16)
    else:
        x = x_ref[...].astype(jnp.bfloat16)

    # 1x1 Conv2d == per-row linear: bf16 operands on the MXU, f32 accumulation.
    # Conv bias skipped: training-mode BatchNorm cancels it exactly.
    h = jnp.dot(x, w_ref[...], preferred_element_type=jnp.float32)
    h_ref[...] = h.astype(h_ref.dtype)          # bf16 inter-layer activation

    # Per-channel sum / sum-of-squares as sublane-aligned partials: reducing over the
    # leading axis of (tile_rows/8, 8, C) is pure VALU vreg adds (no MXU, no XLU).
    # Zero-padded rows/channels contribute nothing, so dividing by the true row count
    # outside the kernel is exact.
    h3 = h.reshape(tile_rows // _SUBLANE, _SUBLANE, h.shape[-1])
    s = jnp.sum(h3, axis=0)                     # (8, C) partial sums
    sq = jnp.sum(h3 * h3, axis=0)               # (8, C) partial sums of squares
    stats_ref[...] = jnp.concatenate([s, sq], axis=0)[None, :, :]


def _conv_stats_call(x, w, scale_shift, *, tile_rows, total_rows, vmem_limit):
    rows_pad, cin_dim = x.shape
    cout_p = w.shape[1]
    num_tiles = rows_pad // tile_rows
    apply_bn = scale_shift is not None
    mask_rows = apply_bn and (total_rows < rows_pad)

    kernel = partial(_conv_stats_kernel, apply_bn=apply_bn, mask_rows=mask_rows,
                     tile_rows=tile_rows, total_rows=total_rows)

    in_specs = [pl.BlockSpec((tile_rows, cin_dim), lambda i: (i, 0))]
    args = [x]
    if apply_bn:
        in_specs += [pl.BlockSpec((1, cin_dim), lambda i: (0, 0)),
                     pl.BlockSpec((1, cin_dim), lambda i: (0, 0))]
        args += [scale_shift[0], scale_shift[1]]
    in_specs += [pl.BlockSpec((cin_dim, cout_p), lambda i: (0, 0))]
    args += [w]

    out_shape = (jax.ShapeDtypeStruct((rows_pad, cout_p), jnp.bfloat16),
                 jax.ShapeDtypeStruct((num_tiles, 2 * _SUBLANE, cout_p), jnp.float32))
    out_specs = (pl.BlockSpec((tile_rows, cout_p), lambda i: (i, 0)),
                 pl.BlockSpec((1, 2 * _SUBLANE, cout_p), lambda i: (i, 0, 0)))

    in_bytes = x.dtype.itemsize
    flops = 2 * rows_pad * cout_p * cin_dim + 8 * rows_pad * cout_p
    bytes_accessed = (in_bytes * rows_pad * cin_dim + 2 * rows_pad * cout_p
                      + 2 * cin_dim * cout_p
                      + 4 * num_tiles * 2 * _SUBLANE * cout_p)

    return pl.pallas_call(
        kernel,
        grid=(num_tiles,),
        in_specs=in_specs,
        out_specs=out_specs,
        out_shape=out_shape,
        compiler_params=pltpu.CompilerParams(
            dimension_semantics=("parallel",),   # v7x: shard row tiles over both TCs
            vmem_limit_bytes=vmem_limit),
        cost_estimate=pl.CostEstimate(flops=flops, transcendentals=0,
                                      bytes_accessed=bytes_accessed),
    )(*args)


# ----------------------------------------------------------------------------
# Kernel B (last layer only): folded BN + ReLU, then max over the K neighbor rows.
# ----------------------------------------------------------------------------
def _bn_relu_max_kernel(h_ref, scale_ref, shift_ref, o_ref, *, k, tile_rows):
    h = jnp.maximum(
        h_ref[...].astype(jnp.float32) * scale_ref[...] + shift_ref[...], 0.0)
    h = h.reshape(tile_rows // k, k, h.shape[-1])
    o_ref[...] = jnp.max(h, axis=1)


def _bn_relu_max_call(h, scale, shift, k, *, tile_rows, vmem_limit):
    rows_pad, c_p = h.shape
    num_tiles = rows_pad // tile_rows
    tile_out = tile_rows // k
    out_rows = rows_pad // k
    kernel = partial(_bn_relu_max_kernel, k=k, tile_rows=tile_rows)
    return pl.pallas_call(
        kernel,
        grid=(num_tiles,),
        in_specs=[pl.BlockSpec((tile_rows, c_p), lambda i: (i, 0)),
                  pl.BlockSpec((1, c_p), lambda i: (0, 0)),
                  pl.BlockSpec((1, c_p), lambda i: (0, 0))],
        out_specs=pl.BlockSpec((tile_out, c_p), lambda i: (i, 0)),
        out_shape=jax.ShapeDtypeStruct((out_rows, c_p), jnp.float32),
        compiler_params=pltpu.CompilerParams(
            dimension_semantics=("parallel",),
            vmem_limit_bytes=vmem_limit),
        cost_estimate=pl.CostEstimate(
            flops=4 * rows_pad * c_p, transcendentals=0,
            bytes_accessed=2 * rows_pad * c_p + 4 * out_rows * c_p + 8 * c_p),
    )(h, scale, shift)


# ----------------------------------------------------------------------------
# Whole shared-MLP + max-pool pipeline.
# ----------------------------------------------------------------------------
def pointnet_mlp_max(new_points, layer_params):
    """new_points: [B, S, K, Cin] grouped features -> [B, S, C_last] pooled features."""
    B, S, K, Cin = new_points.shape
    rows = B * S * K
    vmem_limit, tile_target = _hw_budgets()
    c_max_p = max(p["w"].shape[1] for p in layer_params)   # lane-padded widths
    tile_rows, rows_pad = _pick_row_tiling(rows, K, 2 * c_max_p, tile_target)

    # k-minor flatten (contiguous reshape, no HBM transpose); pad rows to the tile
    # multiple only -- the tiny first-layer channel count stays unpadded in HBM.
    x = new_points.reshape(rows, Cin).astype(jnp.float32)
    if rows_pad > rows:
        x = jnp.pad(x, ((0, rows_pad - rows), (0, 0)))

    h = x
    scale_shift = None
    for p in layer_params:
        h, stats = _conv_stats_call(h, p["w"], scale_shift,
                                    tile_rows=tile_rows, total_rows=rows,
                                    vmem_limit=vmem_limit)
        # Tiny per-channel reduction of per-tile sublane partials + single-pass
        # variance (E[h^2]-E[h]^2) + BN affine folding -- all in plain JAX.
        ch_sum = jnp.sum(stats[:, :_SUBLANE, :], axis=(0, 1))[None, :]
        ch_sumsq = jnp.sum(stats[:, _SUBLANE:, :], axis=(0, 1))[None, :]
        mean = ch_sum / rows
        var = jnp.maximum(ch_sumsq / rows - mean * mean, 0.0)
        scale = p["gamma"] * lax.rsqrt(var + BN_EPS)
        shift = p["beta"] - mean * scale
        scale_shift = (scale, shift)

    out = _bn_relu_max_call(h, scale_shift[0], scale_shift[1], K,
                            tile_rows=tile_rows, vmem_limit=vmem_limit)
    out = out[:B * S, :layer_params[-1]["c_out"]]
    return out.reshape(B, S, -1)


# ----------------------------------------------------------------------------
# Plain-JAX glue: sampling / grouping (mirrors the PyTorch helper functions).
# ----------------------------------------------------------------------------
def square_distance(src, dst):
    dist = -2.0 * jnp.matmul(src, jnp.transpose(dst, (0, 2, 1)))
    dist = dist + jnp.sum(src ** 2, -1)[..., None]
    dist = dist + jnp.sum(dst ** 2, -1)[:, None, :]
    return dist


def index_points(points, idx):
    B = points.shape[0]
    C = points.shape[-1]
    idx_flat = idx.reshape(B, -1)
    gathered = jnp.take_along_axis(
        points,
        jnp.broadcast_to(idx_flat[..., None], (B, idx_flat.shape[1], C)),
        axis=1)
    return gathered.reshape(idx.shape + (C,))


def farthest_point_sample(xyz, npoint, init_farthest):
    B, N, _ = xyz.shape
    centroids = jnp.zeros((B, npoint), dtype=jnp.int32)
    distance = jnp.full((B, N), 1e10, dtype=jnp.float32)
    farthest = init_farthest.astype(jnp.int32)

    def body(i, carry):
        centroids, distance, farthest = carry
        centroids = centroids.at[:, i].set(farthest)
        centroid = jnp.take_along_axis(
            xyz, jnp.broadcast_to(farthest[:, None, None], (B, 1, 3)), axis=1)
        dist = jnp.sum((xyz - centroid) ** 2, -1)
        distance = jnp.minimum(distance, dist)
        farthest = jnp.argmax(distance, axis=-1).astype(jnp.int32)
        return centroids, distance, farthest

    centroids, _, _ = lax.fori_loop(0, npoint, body, (centroids, distance, farthest))
    return centroids


def query_ball_point(radius, nsample, xyz, new_xyz):
    B, N, _ = xyz.shape
    S = new_xyz.shape[1]
    group_idx = jnp.broadcast_to(
        jnp.arange(N, dtype=jnp.int32)[None, None, :], (B, S, N))
    sqrdists = square_distance(new_xyz, xyz)
    group_idx = jnp.where(sqrdists > radius ** 2, N, group_idx)
    group_idx = jnp.sort(group_idx, axis=-1)[:, :, :nsample]
    group_first = group_idx[:, :, 0:1]
    group_idx = jnp.where(group_idx == N, group_first, group_idx)
    return group_idx


def sample_and_group(npoint, radius, nsample, xyz, points, init_farthest):
    fps_idx = farthest_point_sample(xyz, npoint, init_farthest)
    new_xyz = index_points(xyz, fps_idx)                       # [B, S, 3]
    idx = query_ball_point(radius, nsample, xyz, new_xyz)      # [B, S, K]
    grouped_xyz = index_points(xyz, idx)                       # [B, S, K, 3]
    grouped_xyz_norm = grouped_xyz - new_xyz[:, :, None, :]
    if points is not None:
        grouped_points = index_points(points, idx)
        new_points = jnp.concatenate([grouped_xyz_norm, grouped_points], axis=-1)
    else:
        new_points = grouped_xyz_norm
    return new_xyz, new_points


def sample_and_group_all(xyz, points):
    B, N, C = xyz.shape
    new_xyz = jnp.zeros((B, 1, C), dtype=xyz.dtype)
    grouped_xyz = xyz.reshape(B, 1, N, C)
    if points is not None:
        new_points = jnp.concatenate(
            [grouped_xyz, points.reshape(B, 1, N, -1)], axis=-1)
    else:
        new_points = grouped_xyz
    return new_xyz, new_points


# ----------------------------------------------------------------------------
# Module equivalent.
# ----------------------------------------------------------------------------
class PointNetSetAbstraction:
    def __init__(self, npoint, radius, nsample, in_channel, mlp, group_all, key):
        self.npoint = npoint
        self.radius = radius
        self.nsample = nsample
        self.group_all = group_all
        self.layer_params = []
        last = in_channel
        cin_dim = in_channel          # layer 1 keeps its natural (unpadded) channels
        for out_c in mlp:
            key, kw, kb = jax.random.split(key, 3)
            bound = 1.0 / math.sqrt(last)  # Conv2d(kernel=1) default init bound
            w = jax.random.uniform(kw, (last, out_c), jnp.float32, -bound, bound)
            # Conv2d bias exists in the torch module but is exactly cancelled by the
            # training-mode BatchNorm mean subtraction, so it is never applied.
            _bias = jax.random.uniform(kb, (1, out_c), jnp.float32, -bound, bound)
            cout_p = _round_up(out_c, _LANE)
            w_p = jnp.zeros((cin_dim, cout_p), jnp.float32).at[:last, :out_c].set(w)
            gamma = jnp.zeros((1, cout_p), jnp.float32).at[:, :out_c].set(1.0)
            beta = jnp.zeros((1, cout_p), jnp.float32)
            self.layer_params.append({
                "w": w_p.astype(jnp.bfloat16),   # bf16 weights for the MXU fast path
                "gamma": gamma, "beta": beta, "c_out": out_c})
            last = out_c
            cin_dim = cout_p

    def __call__(self, xyz, points, key):
        # xyz: [B, 3, N], points: [B, D, N]  (same conventions as the torch module)
        B, _, N = xyz.shape
        xyz_t = jnp.transpose(xyz, (0, 2, 1))
        points_t = jnp.transpose(points, (0, 2, 1)) if points is not None else None
        if self.group_all:
            new_xyz, new_points = sample_and_group_all(xyz_t, points_t)
        else:
            init_farthest = jax.random.randint(key, (B,), 0, N)
            new_xyz, new_points = sample_and_group(
                self.npoint, self.radius, self.nsample, xyz_t, points_t, init_farthest)
        # new_points: [B, S, K, Cin] (k-minor) -> MLP + K-max entirely in Pallas.
        feat = pointnet_mlp_max(new_points, self.layer_params)    # [B, S, C_last]
        new_points_out = jnp.transpose(feat, (0, 2, 1))           # [B, C', S]
        new_xyz_out = jnp.transpose(new_xyz, (0, 2, 1))           # [B, 3, S]
        return new_xyz_out, new_points_out


if __name__ == "__main__":
    key = jax.random.PRNGKey(0)
    k_xyz, k_pts, k_init, k_fps = jax.random.split(key, 4)

    B, N, D = 2, 16, 4
    npoint, radius, nsample = 8, 0.5, 8
    mlp_channels = [16, 32]

    xyz = jax.random.normal(k_xyz, (B, 3, N), jnp.float32)
    points = jax.random.normal(k_pts, (B, D, N), jnp.float32)

    sa = PointNetSetAbstraction(
        npoint=npoint, radius=radius, nsample=nsample,
        in_channel=3 + D, mlp=mlp_channels, group_all=False, key=k_init)

    new_xyz, new_points = sa(xyz, points, k_fps)
    jax.block_until_ready((new_xyz, new_points))

    assert new_xyz.shape == (B, 3, npoint), new_xyz.shape
    assert new_points.shape == (B, mlp_channels[-1], npoint), new_points.shape
    assert bool(jnp.all(jnp.isfinite(new_points)))
    print("KERNEL_OK")
</pallas_src>

<mosaic_0001>
module attributes {stable_mosaic.version = 11 : i64} {
  func.func @_conv_stats_kernel(%arg0: i32, %arg1: memref<128x7xf32, #tpu.memory_space<vmem>>, %arg2: memref<7x128xbf16, #tpu.memory_space<vmem>>, %arg3: memref<128x128xbf16, #tpu.memory_space<vmem>>, %arg4: memref<1x16x128xf32, #tpu.memory_space<vmem>>) attributes {dimension_semantics = [#tpu.dimension_semantics<parallel>], iteration_bounds = array<i64: 1>, scalar_prefetch = 0 : i64, scratch_operands = 0 : i64, tpu.core_type = #tpu.core_type<tc>, window_params = [{transform_indices = @transform_0, window_bounds = array<i64: 128, 7>}, {pipeline_mode = #tpu.pipeline_mode<synchronous>, transform_indices = @transform_1, window_bounds = array<i64: 7, 128>}, {transform_indices = @transform_2, window_bounds = array<i64: 128, 128>}, {transform_indices = @transform_3, window_bounds = array<i64: 1, 16, 128>}]} {
    %c0 = arith.constant 0 : index
    %c0_0 = arith.constant 0 : index
    %0 = vector.load %arg1[%c0, %c0_0] : memref<128x7xf32, #tpu.memory_space<vmem>>, vector<128x7xf32>
    %1 = arith.truncf %0 : vector<128x7xf32> to vector<128x7xbf16>
    %c0_1 = arith.constant 0 : index
    %c0_2 = arith.constant 0 : index
    %2 = vector.load %arg2[%c0_1, %c0_2] : memref<7x128xbf16, #tpu.memory_space<vmem>>, vector<7x128xbf16>
    %cst = arith.constant dense<0.000000e+00> : vector<128x128xf32>
    %3 = tpu.matmul %1, %2, %cst {dimension_numbers = #tpu.dot_dimension_numbers<[1], [0], [0], [1], [0, 0, 1, 1], [], []>} : vector<128x7xbf16>, vector<7x128xbf16>, vector<128x128xf32> -> vector<128x128xf32>
    %4 = arith.truncf %3 : vector<128x128xf32> to vector<128x128xbf16>
    %c0_3 = arith.constant 0 : index
    %c0_4 = arith.constant 0 : index
    %5 = vector.load %arg3[%c0_3, %c0_4] : memref<128x128xbf16, #tpu.memory_space<vmem>>, vector<128x128xbf16>
    tpu.vector_store %arg3[%c0_3, %c0_4], %4 {strides = array<i32>} : memref<128x128xbf16, #tpu.memory_space<vmem>>, vector<128x128xbf16>,
    %6 = vector.shape_cast %3 : vector<128x128xf32> to vector<16x8x128xf32>
    %cst_5 = arith.constant dense<0.000000e+00> : vector<8x128xf32>
    %7 = vector.multi_reduction <add>, %6, %cst_5 [0] : vector<16x8x128xf32> to vector<8x128xf32>
    %8 = arith.mulf %6, %6 : vector<16x8x128xf32>
    %cst_6 = arith.constant dense<0.000000e+00> : vector<8x128xf32>
    %9 = vector.multi_reduction <add>, %8, %cst_6 [0] : vector<16x8x128xf32> to vector<8x128xf32>
    %10 = tpu.concatenate %7, %9 in 0 : vector<8x128xf32>, vector<8x128xf32> -> vector<16x128xf32>
    %11 = vector.shape_cast %10 : vector<16x128xf32> to vector<1x16x128xf32>
    %c0_7 = arith.constant 0 : index
    %c0_8 = arith.constant 0 : index
    %c0_9 = arith.constant 0 : index
    %12 = vector.load %arg4[%c0_7, %c0_8, %c0_9] : memref<1x16x128xf32, #tpu.memory_space<vmem>>, vector<1x16x128xf32>
    tpu.vector_store %arg4[%c0_7, %c0_8, %c0_9], %11 {strides = array<i32>} : memref<1x16x128xf32, #tpu.memory_space<vmem>>, vector<1x16x128xf32>,
    return
  }
  func.func @transform_0(%arg0: i32) -> (i32, i32) {
    %c0_i32 = arith.constant 0 : i32
    %c0_i32_0 = arith.constant 0 : i32
    return %arg0, %c0_i32 : i32, i32
  }
  func.func @transform_1(%arg0: i32) -> (i32, i32) {
    %c0_i32 = arith.constant 0 : i32
    %c0_i32_0 = arith.constant 0 : i32
    %c0_i32_1 = arith.constant 0 : i32
    return %c0_i32, %c0_i32_0 : i32, i32
  }
  func.func @transform_2(%arg0: i32) -> (i32, i32) {
    %c0_i32 = arith.constant 0 : i32
    %c0_i32_0 = arith.constant 0 : i32
    return %arg0, %c0_i32 : i32, i32
  }
  func.func @transform_3(%arg0: i32) -> (i32, i32, i32) {
    %c0_i32 = arith.constant 0 : i32
    %c0_i32_0 = arith.constant 0 : i32
    %c0_i32_1 = arith.constant 0 : i32
    return %arg0, %c0_i32, %c0_i32_0 : i32, i32, i32
  }
}

</mosaic_0001>

<llo_original>
// kernel: tpu_custom_call.1
$region0: #{tpu_custom_call.1}
  #allocation0 [shape = 'u32[]', space=smem, size = 0x4, offset = 0x4, fixed_abs, tag = 'smem constant byte address 0x4 - core index']
  #allocation1 [shape = 'u32[144,128]{1,0:T(1,128)}', space=vmem, size = 0x12000, scoped, tag = 'internal scratch']
  %s0 = inlined_call_operand.vmem [shape: f32[128,7], index: 0, kind: input, shape index: {}]
  %s1 = inlined_call_operand.vmem [shape: bf16[7,128], index: 1, kind: input, shape index: {}]
  %s2 = inlined_call_operand.hbm [shape: bf16[128,128], index: 2, kind: output, shape index: {0}]
  %s3 = inlined_call_operand.hbm [shape: f32[1,16,128], index: 3, kind: output, shape index: {1}]
  %4 = xla_tuple %s2, %s3
  %s5 = sld [smem:[#allocation0]]
  $region26: #{tpu_custom_call.1} parent=0
    _
  %s7 = ssub.s32 1, %s5
  %s8 = scalar_select 0, %s7, %s5
  $region1: #{tpu_custom_call.1} parent=0
    #allocation2 [shape = 'u8[32768]{0}', space=vmem, size = 0x8000, scoped, tag = 'output window, operand 0, single buffered']
    #allocation3 [shape = 's32[1]{0}', space=sflag, size = 0x4, scoped, tag = 'scoped memory for tpu_custom_call.1']
    #allocation4 [shape = 'u8[8192]{0}', space=vmem, size = 0x2000, scoped, tag = 'output window, operand 1, single buffered']
    #allocation5 [shape = 's32[1]{0}', space=sflag, size = 0x4, scoped, tag = 'scoped memory for tpu_custom_call.1']
    %9 = vsyncpa [#allocation3], 0
    %10 = vsyncpa [#allocation5], 0
    // Predicated region
    $region2: #{tpu_custom_call.1} parent=1 // pred_check
      _
    $region3: #{tpu_custom_call.1} parent=1 // pred_check_branch
      %12 = sbr.rel (0) target = $region5
    $region4: #{tpu_custom_call.1} parent=1 // pred_region
      _
    $region5: #{tpu_custom_call.1} parent=1 // pred_fallthru
      _
    // Predicated region
    $region6: #{tpu_custom_call.1} parent=1 // pred_check
      _
    $region7: #{tpu_custom_call.1} parent=1 // pred_check_branch
      %14 = sbr.rel (0) target = $region9
    $region8: #{tpu_custom_call.1} parent=1 // pred_region
      _
    $region9: #{tpu_custom_call.1} parent=1 // pred_fallthru
      _
    %v16 = vld [vmem:[%s0] sm:$0xff]
    %v17 = vld [vmem:[%s0 + $0x8] sm:$0xff]
    %v18 = vld [vmem:[%s0 + $0x10] sm:$0xff]
    %v19 = vld [vmem:[%s0 + $0x18] sm:$0xff]
    %v20 = vld [vmem:[%s0 + $0x20] sm:$0xff]
    %v21 = vld [vmem:[%s0 + $0x28] sm:$0xff]
    %v22 = vld [vmem:[%s0 + $0x30] sm:$0xff]
    %v23 = vld [vmem:[%s0 + $0x38] sm:$0xff]
    %v24 = vld [vmem:[%s0 + $0x40] sm:$0xff]
    %v25 = vld [vmem:[%s0 + $0x48] sm:$0xff]
    %v26 = vld [vmem:[%s0 + $0x50] sm:$0xff]
    %v27 = vld [vmem:[%s0 + $0x58] sm:$0xff]
    %v28 = vld [vmem:[%s0 + $0x60] sm:$0xff]
    %v29 = vld [vmem:[%s0 + $0x68] sm:$0xff]
    %v30 = vld [vmem:[%s0 + $0x70] sm:$0xff]
    %v31 = vld [vmem:[%s0 + $0x78] sm:$0xff]
    %v32 = vpack.c.bf16 %v17, %v16
    %v33 = vpack.c.bf16 %v19, %v18
    %v34 = vpack.c.bf16 %v21, %v20
    %v35 = vpack.c.bf16 %v23, %v22
    %v36 = vpack.c.bf16 %v25, %v24
    %v37 = vpack.c.bf16 %v27, %v26
    %v38 = vpack.c.bf16 %v29, %v28
    %v39 = vpack.c.bf16 %v31, %v30
    %v40 = vld [vmem:[%s1] sm:$0xf]
    %vm41 = vcmask 56320
    %v43 = vsel %vm41, %v32, 0
    %v46 = vsel %vm41, %v33, 0
    %v49 = vsel %vm41, %v34, 0
    %v52 = vsel %vm41, %v35, 0
    %v55 = vsel %vm41, %v36, 0
    %v58 = vsel %vm41, %v37, 0
    %v61 = vsel %vm41, %v38, 0
    %v64 = vsel %vm41, %v39, 0
    %vm66 = vcmask 1042432
    %vm67 = vcmask 1043456
    %v68 = vsel %vm66, 4294967295, 65535
    %v69 = vsel %vm67, %v68, 0
    %v71 = vand.u32 %v40, %v69
    %73 = vmatprep.subr.bf16.mxu0 0
    %74 = vmatpush1.bf16.msra.mxu0 0
    %75 = vmatprep.subr.bf16.mxu0 0
    %76 = vmatpush1.bf16.msra.mxu0 0
    %77 = vmatprep.subr.bf16.mxu0 0
    %78 = vmatpush1.bf16.msra.mxu0 0
    %79 = vmatprep.subr.bf16.mxu0 0
    %80 = vmatpush1.bf16.msra.mxu0 0
    %81 = vmatprep.subr.bf16.mxu0 0
    %82 = vmatpush1.bf16.msra.mxu0 0
    %83 = vmatprep.subr.bf16.mxu0 0
    %84 = vmatpush1.bf16.msra.mxu0 0
    %85 = vmatprep.subr.bf16.mxu0 0
    %86 = vmatpush1.bf16.msra.mxu0 0
    %87 = vmatprep.subr.bf16.mxu0 0
    %88 = vmatpush1.bf16.msra.mxu0 %v71
    %89 = vmatprep.subr.bf16.mxu0 0
    %90 = vmatpush2.bf16.msra.mxu0 0
    %91 = vmatprep.subr.bf16.mxu0 0
    %92 = vmatpush2.bf16.msra.mxu0 0
    %93 = vmatprep.subr.bf16.mxu0 0
    %94 = vmatpush2.bf16.msra.mxu0 0
    %95 = vmatprep.subr.bf16.mxu0 0
    %96 = vmatpush2.bf16.msra.mxu0 0
    %97 = vmatprep.subr.bf16.mxu0 0
    %98 = vmatpush2.bf16.msra.mxu0 0
    %99 = vmatprep.subr.bf16.mxu0 0
    %100 = vmatpush2.bf16.msra.mxu0 0
    %101 = vmatprep.subr.bf16.mxu0 0
    %102 = vmatpush2.bf16.msra.mxu0 0
    %103 = vmatprep.subr.bf16.mxu0 0
    %104 = vmatpush2.bf16.msra.mxu0 0
    %105 = vmatprep.mubr.bf16.mxu0 0
    %106 = vmatmul.mubr.bf16.gmra.mxu0 %v43
    %v107 = vpop.f32.mrf.mxu0
    %v108 = vadd.f32 0.0, %v107
    %v109 = vpop.f32.mrf.mxu0
    %v110 = vpop.f32.mrf.mxu0
    %v111 = vadd.f32 0.0, %v110
    %v112 = vpop.f32.mrf.mxu0
    %113 = vmatprep.mubr.bf16.mxu0 0
    %114 = vmatmul.mubr.bf16.gmra.mxu0 %v46
    %v115 = vpop.f32.mrf.mxu0
    %v116 = vadd.f32 0.0, %v115
    %v117 = vpop.f32.mrf.mxu0
    %v118 = vpop.f32.mrf.mxu0
    %v119 = vadd.f32 0.0, %v118
    %v120 = vpop.f32.mrf.mxu0
    %121 = vmatprep.mubr.bf16.mxu0 0
    %122 = vmatmul.mubr.bf16.gmra.mxu0 %v49
    %v123 = vpop.f32.mrf.mxu0
    %v124 = vadd.f32 0.0, %v123
    %v125 = vpop.f32.mrf.mxu0
    %v126 = vpop.f32.mrf.mxu0
    %v127 = vadd.f32 0.0, %v126
    %v128 = vpop.f32.mrf.mxu0
    %129 = vmatprep.mubr.bf16.mxu0 0
    %130 = vmatmul.mubr.bf16.gmra.mxu0 %v52
    %v131 = vpop.f32.mrf.mxu0
    %v132 = vadd.f32 0.0, %v131
    %v133 = vpop.f32.mrf.mxu0
    %v134 = vpop.f32.mrf.mxu0
    %v135 = vadd.f32 0.0, %v134
    %v136 = vpop.f32.mrf.mxu0
    %137 = vmatprep.mubr.bf16.mxu0 0
    %138 = vmatmul.mubr.bf16.gmra.mxu0 %v55
    %v139 = vpop.f32.mrf.mxu0
    %v140 = vadd.f32 0.0, %v139
    %v141 = vpop.f32.mrf.mxu0
    %v142 = vpop.f32.mrf.mxu0
    %v143 = vadd.f32 0.0, %v142
    %v144 = vpop.f32.mrf.mxu0
    %145 = vmatprep.mubr.bf16.mxu0 0
    %146 = vmatmul.mubr.bf16.gmra.mxu0 %v58
    %v147 = vpop.f32.mrf.mxu0
    %v148 = vadd.f32 0.0, %v147
    %v149 = vpop.f32.mrf.mxu0
    %v150 = vpop.f32.mrf.mxu0
    %v151 = vadd.f32 0.0, %v150
    %v152 = vpop.f32.mrf.mxu0
    %153 = vmatprep.mubr.bf16.mxu0 0
    %154 = vmatmul.mubr.bf16.gmra.mxu0 %v61
    %v155 = vpop.f32.mrf.mxu0
    %v156 = vadd.f32 0.0, %v155
    %v157 = vpop.f32.mrf.mxu0
    %v158 = vpop.f32.mrf.mxu0
    %v159 = vadd.f32 0.0, %v158
    %v160 = vpop.f32.mrf.mxu0
    %161 = vmatprep.mubr.bf16.mxu0 0
    %162 = vmatmul.mubr.bf16.gmra.mxu0 %v64
    %v163 = vpop.f32.mrf.mxu0
    %v164 = vadd.f32 0.0, %v163
    %v165 = vpop.f32.mrf.mxu0
    %v166 = vpop.f32.mrf.mxu0
    %v167 = vadd.f32 0.0, %v166
    %v168 = vpop.f32.mrf.mxu0
    %169 = vdwg.mxu0
    %v170 = vpack.c.bf16 %v111, %v108
    %v171 = vpack.c.bf16 %v119, %v116
    %v172 = vpack.c.bf16 %v127, %v124
    %v173 = vpack.c.bf16 %v135, %v132
    %v174 = vpack.c.bf16 %v143, %v140
    %v175 = vpack.c.bf16 %v151, %v148
    %v176 = vpack.c.bf16 %v159, %v156
    %v177 = vpack.c.bf16 %v167, %v164
    %v186 = vunpack.c.l.b16 %v170
    %v187 = vunpack.c.h.b16 %v170
    %v188 = vunpack.c.l.b16 %v171
    %v189 = vunpack.c.h.b16 %v171
    %v190 = vunpack.c.l.b16 %v172
    %v191 = vunpack.c.h.b16 %v172
    %v192 = vunpack.c.l.b16 %v173
    %v193 = vunpack.c.h.b16 %v173
    %v194 = vunpack.c.l.b16 %v174
    %v195 = vunpack.c.h.b16 %v174
    %v196 = vunpack.c.l.b16 %v175
    %v197 = vunpack.c.h.b16 %v175
    %v198 = vunpack.c.l.b16 %v176
    %v199 = vunpack.c.h.b16 %v176
    %v200 = vunpack.c.l.b16 %v177
    %v201 = vunpack.c.h.b16 %v177
    %v202 = vpack.c.b16 %v186, %v186
    %v203 = vpack.c.b16 %v187, %v187
    %v204 = vpack.c.b16 %v188, %v188
    %v205 = vpack.c.b16 %v189, %v189
    %v206 = vpack.c.b16 %v190, %v190
    %v207 = vpack.c.b16 %v191, %v191
    %v208 = vpack.c.b16 %v192, %v192
    %v209 = vpack.c.b16 %v193, %v193
    %v210 = vpack.c.b16 %v194, %v194
    %v211 = vpack.c.b16 %v195, %v195
    %v212 = vpack.c.b16 %v196, %v196
    %v213 = vpack.c.b16 %v197, %v197
    %v214 = vpack.c.b16 %v198, %v198
    %v215 = vpack.c.b16 %v199, %v199
    %v216 = vpack.c.b16 %v200, %v200
    %v217 = vpack.c.b16 %v201, %v201
    %234 = vst [vmem:[#allocation2] sm:$0xf] %v202
    %235 = vst [vmem:[#allocation2 + $0x4] sm:$0xf] %v203
    %236 = vst [vmem:[#allocation2 + $0x8] sm:$0xf] %v204
    %237 = vst [vmem:[#allocation2 + $0xc] sm:$0xf] %v205
    %238 = vst [vmem:[#allocation2 + $0x10] sm:$0xf] %v206
    %239 = vst [vmem:[#allocation2 + $0x14] sm:$0xf] %v207
    %240 = vst [vmem:[#allocation2 + $0x18] sm:$0xf] %v208
    %241 = vst [vmem:[#allocation2 + $0x1c] sm:$0xf] %v209
    %242 = vst [vmem:[#allocation2 + $0x20] sm:$0xf] %v210
    %243 = vst [vmem:[#allocation2 + $0x24] sm:$0xf] %v211
    %244 = vst [vmem:[#allocation2 + $0x28] sm:$0xf] %v212
    %245 = vst [vmem:[#allocation2 + $0x2c] sm:$0xf] %v213
    %246 = vst [vmem:[#allocation2 + $0x30] sm:$0xf] %v214
    %247 = vst [vmem:[#allocation2 + $0x34] sm:$0xf] %v215
    %248 = vst [vmem:[#allocation2 + $0x38] sm:$0xf] %v216
    %249 = vst [vmem:[#allocation2 + $0x3c] sm:$0xf] %v217
    %v250 = vadd.f32 %v108, %v111
    %v251 = vadd.f32 %v250, %v116
    %v252 = vadd.f32 %v251, %v119
    %v253 = vadd.f32 %v252, %v124
    %v254 = vadd.f32 %v253, %v127
    %v255 = vadd.f32 %v254, %v132
    %v256 = vadd.f32 %v255, %v135
    %v257 = vadd.f32 %v256, %v140
    %v258 = vadd.f32 %v257, %v143
    %v259 = vadd.f32 %v258, %v148
    %v260 = vadd.f32 %v259, %v151
    %v261 = vadd.f32 %v260, %v156
    %v262 = vadd.f32 %v261, %v159
    %v263 = vadd.f32 %v262, %v164
    %v264 = vadd.f32 %v263, %v167
    %v265 = vmul.f32 %v108, %v108
    %v266 = vmul.f32 %v111, %v111
    %v267 = vmul.f32 %v116, %v116
    %v268 = vmul.f32 %v119, %v119
    %v269 = vmul.f32 %v124, %v124
    %v270 = vmul.f32 %v127, %v127
    %v271 = vmul.f32 %v132, %v132
    %v272 = vmul.f32 %v135, %v135
    %v273 = vmul.f32 %v140, %v140
    %v274 = vmul.f32 %v143, %v143
    %v275 = vmul.f32 %v148, %v148
    %v276 = vmul.f32 %v151, %v151
    %v277 = vmul.f32 %v156, %v156
    %v278 = vmul.f32 %v159, %v159
    %v279 = vmul.f32 %v164, %v164
    %v280 = vmul.f32 %v167, %v167
    %v281 = vadd.f32 %v265, %v266
    %v282 = vadd.f32 %v281, %v267
    %v283 = vadd.f32 %v282, %v268
    %v284 = vadd.f32 %v283, %v269
    %v285 = vadd.f32 %v284, %v270
    %v286 = vadd.f32 %v285, %v271
    %v287 = vadd.f32 %v286, %v272
    %v288 = vadd.f32 %v287, %v273
    %v289 = vadd.f32 %v288, %v274
    %v290 = vadd.f32 %v289, %v275
    %v291 = vadd.f32 %v290, %v276
    %v292 = vadd.f32 %v291, %v277
    %v293 = vadd.f32 %v292, %v278
    %v294 = vadd.f32 %v293, %v279
    %v295 = vadd.f32 %v294, %v280
    %296 = vst [vmem:[#allocation4] sm:$0xff] %v264
    %297 = vst [vmem:[#allocation4 + $0x8] sm:$0xff] %v295
    // Predicated region
    $region10: #{tpu_custom_call.1} parent=1 // pred_check
      _
    $region11: #{tpu_custom_call.1} parent=1 // pred_check_branch
      %299 = sbr.rel (0) target = $region13
    $region12: #{tpu_custom_call.1} parent=1 // pred_region
      %s301 = ssub.s32 1024, 1024
      %302 = vsyncadd [#allocation3], %s301
      %s303 = sshll.u32 [#allocation2], 4
      %s304 = int_to_ptr.vmem [resolvable:$true] %s303
      %309 = dma.vmem_to_hbm [thread:$0]  %s304, 1024, %s2, [#allocation3], 64, 64, 4
    $region13: #{tpu_custom_call.1} parent=1 // pred_fallthru
      _
    // Predicated region
    $region14: #{tpu_custom_call.1} parent=1 // pred_check
      _
    $region15: #{tpu_custom_call.1} parent=1 // pred_check_branch
      %311 = sbr.rel (0) target = $region17
    $region16: #{tpu_custom_call.1} parent=1 // pred_region
      %s313 = ssub.s32 256, 256
      %314 = vsyncadd [#allocation5], %s313
      %s315 = sshll.u32 [#allocation4], 4
      %s316 = int_to_ptr.vmem [resolvable:$true] %s315
      %321 = dma.vmem_to_hbm [thread:$0]  %s316, 256, %s3, [#allocation5], 128, 128, 8
    $region17: #{tpu_custom_call.1} parent=1 // pred_fallthru
      _
    // Predicated region
    $region18: #{tpu_custom_call.1} parent=1 // pred_check
      _
    $region19: #{tpu_custom_call.1} parent=1 // pred_check_branch
      %323 = sbr.rel (0) target = $region21
    $region20: #{tpu_custom_call.1} parent=1 // pred_region
      %324 = dma.done [#allocation3], 1024
    $region21: #{tpu_custom_call.1} parent=1 // pred_fallthru
      _
    // Predicated region
    $region22: #{tpu_custom_call.1} parent=1 // pred_check
      _
    $region23: #{tpu_custom_call.1} parent=1 // pred_check_branch
      %326 = sbr.rel (0) target = $region25
    $region24: #{tpu_custom_call.1} parent=1 // pred_region
      %327 = dma.done [#allocation5], 256
    $region25: #{tpu_custom_call.1} parent=1 // pred_fallthru
      _
    %328 = vsyncpa [#allocation3], 1
    %329 = vsyncpa [#allocation5], 1

</llo_original>
